<compile_context>
chip_gen: v7x
topology: tpu7x:2x2x1
jax: 0.10.0
libtpu: 0.0.40
codegen_flags: <defaults>
</compile_context>

<pallas_src>
import functools

import numpy as np
import jax
import jax.numpy as jnp
from jax.experimental import pallas as pl
from jax.experimental.pallas import tpu as pltpu


_NEG = -3.0e38          # sentinel for "no neighbour seen yet" / masked logit
_NEG_THRESH = -1.5e38   # anything <= this is still the sentinel


def _feat_kernel(xs_ref, ws_ref, feat_ref):
    # xs: (t, W) loss-series rows; ws: (1, W) series_linear weight.
    # Output width 1 -> VPU multiply + lane reduce (no degenerate 1-column MXU matmul).
    feat_ref[...] = jnp.sum(xs_ref[...] * ws_ref[...], axis=1, keepdims=True)


def _agg_kernel(adj_ref, featc_ref, featr_ref, pre_ref, sucp_ref, *, t):
    # Grid = (J, I): j = tile of destination nodes v ("parallel", outer),
    #                i = tile of source nodes u      ("arbitrary", inner reduction).
    #
    # adj_ref   : (t, t)   = adj[u_tile(i), v_tile(j)]  (u on sublanes, v on lanes)
    # featc_ref : (Np, 1)  full feat column, VMEM-resident (constant index map)
    # featr_ref : (1, t)   feat of the destination tile j (re-DMA'd only when j changes)
    # pre_ref   : (1, t)   running max over predecessors for tile j (output-resident over i)
    # sucp_ref  : (1, t, 1) partial successor-max of source tile i w.r.t. dest tile j
    i = pl.program_id(1)
    neg = jnp.float32(_NEG)

    @pl.when(i == 0)
    def _init():
        pre_ref[...] = jnp.full(pre_ref.shape, neg, jnp.float32)

    a = adj_ref[...] > 0                                    # (t, t) edge mask

    si = pl.multiple_of(i * t, t)
    fu = featc_ref[pl.ds(si, t), :]                         # (t, 1) feat[u] of source tile
    fv = featr_ref[...]                                     # (1, t) feat[v] of dest tile

    # pre_feat[v] = max_{u: u->v} feat[u]  -> reduce over sublanes (u axis).
    pre_m = jnp.where(a, fu, neg)
    pre_ref[...] = jnp.maximum(pre_ref[...],
                               jnp.max(pre_m, axis=0, keepdims=True))

    # suc_max[u] = max_{v: u->v} feat[v]   -> reduce over lanes (v axis); partial
    # over this destination tile only, combined across j in the epilogue.
    suc_m = jnp.where(a, fv, neg)
    sucp_ref[0] = jnp.max(suc_m, axis=1, keepdims=True)     # (t, 1)


def _epilogue_kernel(featr_ref, pre_ref, sucp_ref, wg_ref, out_ref, *, n_real):
    # featr/pre/out: lane-dense (1, Np); sucp: (J, Np) partial maxima; wg: (2,) in SMEM.
    thresh = jnp.float32(_NEG_THRESH)

    pre = pre_ref[...]
    pre = jnp.where(pre > thresh, pre, 0.0)                 # no in-edges  -> 0 (DGL fill)
    suc = jnp.max(sucp_ref[...], axis=0, keepdims=True)     # combine per-tile partials
    suc = jnp.where(suc > thresh, suc, 0.0)                 # no out-edges -> 0

    logits = featr_ref[...] + wg_ref[0] * pre + wg_ref[1] * suc

    # Mask padded nodes out of the global softmax.
    lane = jax.lax.broadcasted_iota(jnp.int32, logits.shape, 1)
    logits = jnp.where(lane < n_real, logits, jnp.float32(_NEG))

    m = jnp.max(logits, axis=1, keepdims=True)
    e = jnp.exp(logits - m)
    s = jnp.sum(e, axis=1, keepdims=True)
    out_ref[...] = e * pl.reciprocal(s, approx=False)


def _tiling(n, tile=None):
    """Return (padded N, tile).  Padded N is a multiple of tile; tile is a multiple
    of 128 so int8 (32,128) and f32 (8,128) tiling constraints hold."""
    if tile is not None:
        assert tile % 128 == 0, "tile must be a multiple of 128"
        return ((n + tile - 1) // tile) * tile, tile
    np128 = ((max(n, 1) + 127) // 128) * 128
    if np128 <= 1024:
        return np128, np128          # single tile: whole padded problem per grid step
    t = 1024                         # int8 tile = 1 MiB; double-buffered ~2 MiB VMEM
    return ((n + t - 1) // t) * t, t


def rc_scorer(loss_series, adj_no_self, w_series, w_graph, *, tile=None):
    """loss_series: (N, W) float; adj_no_self: (N, N) adjacency, adj[u, v] != 0 iff
    directed edge u -> v, diagonal already zeroed (g.remove_self_loop());
    w_series: (W,) series_linear weight; w_graph: (2,) graph_linear weight."""
    n, w = loss_series.shape
    npad, t = _tiling(n, tile)
    jt = npad // t

    xs = jnp.asarray(loss_series, jnp.float32)
    adj = jnp.asarray(adj_no_self)
    if adj.dtype != jnp.int8:
        # One-time cast; callers storing adjacency as int8 skip this N^2 pass.
        adj = (adj != 0).astype(jnp.int8)
    if npad != n:
        xs = jnp.pad(xs, ((0, npad - n), (0, 0)))
        adj = jnp.pad(adj, ((0, npad - n), (0, npad - n)))
    ws_row = jnp.asarray(w_series, jnp.float32).reshape(1, w)
    wg = jnp.asarray(w_graph, jnp.float32).reshape(2)

    vmem = pl.BlockSpec(memory_space=pltpu.MemorySpace.VMEM)
    smem = pl.BlockSpec(memory_space=pltpu.MemorySpace.SMEM)

    # 1) series_linear: feat[u] = <loss_series[u], w_series>  -> (Np, 1).
    feat_col = pl.pallas_call(
        _feat_kernel,
        grid=(jt,),
        in_specs=[pl.BlockSpec((t, w), lambda r: (r, 0)),
                  pl.BlockSpec((1, w), lambda r: (0, 0))],
        out_specs=pl.BlockSpec((t, 1), lambda r: (r, 0)),
        out_shape=jax.ShapeDtypeStruct((npad, 1), jnp.float32),
        compiler_params=pltpu.CompilerParams(dimension_semantics=("parallel",)),
    )(xs, ws_row)
    feat_row = feat_col.reshape(1, npad)     # O(N) layout plumbing in the wrapper

    # 2) single-pass graph aggregation: one read of each adjacency tile feeds
    #    both the predecessor-max (output-resident over the inner i axis) and the
    #    successor-max partials (one block per (j, i), combined in the epilogue).
    pre_row, suc_part = pl.pallas_call(
        functools.partial(_agg_kernel, t=t),
        grid=(jt, jt),
        in_specs=[pl.BlockSpec((t, t), lambda j, i: (i, j)),       # adj[u_tile, v_tile]
                  pl.BlockSpec((npad, 1), lambda j, i: (0, 0)),    # feat column, resident
                  pl.BlockSpec((1, t), lambda j, i: (0, j))],      # feat row of dest tile
        out_specs=[pl.BlockSpec((1, t), lambda j, i: (0, j)),      # pre_feat (lane-dense)
                   pl.BlockSpec((1, t, 1), lambda j, i: (j, i, 0))],  # suc partials
        out_shape=[jax.ShapeDtypeStruct((1, npad), jnp.float32),
                   jax.ShapeDtypeStruct((jt, npad, 1), jnp.float32)],
        compiler_params=pltpu.CompilerParams(
            dimension_semantics=("parallel", "arbitrary")),
    )(adj, feat_col, feat_row)
    suc_part = suc_part.reshape(jt, npad)

    # 3) graph_linear + softmax over all (real) nodes, fully lane-dense (1, Np).
    out_row = pl.pallas_call(
        functools.partial(_epilogue_kernel, n_real=n),
        in_specs=[vmem, vmem, vmem, smem],
        out_specs=vmem,
        out_shape=jax.ShapeDtypeStruct((1, npad), jnp.float32),
    )(feat_row, pre_row, suc_part, wg)
    return out_row[0, :n].reshape(n, 1)


def _reference(loss_series, A, w_series, w_graph):
    """Pure-numpy reference for the same forward pass."""
    x = np.asarray(loss_series, np.float64)
    A = np.asarray(A)
    ws = np.asarray(w_series, np.float64)
    wg = np.asarray(w_graph, np.float64)
    n = A.shape[0]
    feat = x @ ws
    pre = np.zeros(n, np.float64)
    suc = np.zeros(n, np.float64)
    for v in range(n):
        preds = np.nonzero(A[:, v])[0]
        succs = np.nonzero(A[v, :])[0]
        if preds.size:
            pre[v] = feat[preds].max()
        if succs.size:
            suc[v] = feat[succs].max()
    logits = feat + wg[0] * pre + wg[1] * suc
    e = np.exp(logits - logits.max())
    return e / e.sum()


if __name__ == "__main__":
    W = 16                            # window_size=16, in_feats=2, out_feats=1
    key = jax.random.PRNGKey(0)
    k1, k2 = jax.random.split(key)

    # series_linear weight exactly as RCScorer.__init__ sets it.
    w_series = jnp.full((W,), 1.0 / W, dtype=jnp.float32)

    # ---- Tests 1 & 2: tiny deterministic graph (node 7 isolated, self-loop removed).
    N1 = 8
    loss1 = jax.random.normal(k1, (N1, W), dtype=jnp.float32)
    edges = [(0, 1), (1, 2), (2, 3), (3, 4), (4, 5), (5, 6), (0, 3), (2, 5), (6, 6)]
    A1 = np.zeros((N1, N1), dtype=np.int8)
    for u, v in edges:
        A1[u, v] = 1
    np.fill_diagonal(A1, 0)           # g.remove_self_loop()
    adj1 = jnp.asarray(A1)            # int8 adjacency -> no wrapper-side cast

    # Test 1: module's default graph_linear weight ([0, -0]).
    wg_default = jnp.array([0.0, -0.0], dtype=jnp.float32)
    out1 = jax.block_until_ready(rc_scorer(loss1, adj1, w_series, wg_default))
    ref1 = _reference(loss1, A1, w_series, wg_default)
    assert out1.shape == (N1, 1)
    assert np.allclose(np.asarray(out1)[:, 0], ref1, atol=1e-5, rtol=1e-5)

    # Test 2: nonzero graph weights so the aggregation path is verified.
    wg_nz = jnp.array([0.7, -0.3], dtype=jnp.float32)
    out2 = jax.block_until_ready(rc_scorer(loss1, adj1, w_series, wg_nz))
    ref2 = _reference(loss1, A1, w_series, wg_nz)
    assert np.allclose(np.asarray(out2)[:, 0], ref2, atol=1e-5, rtol=1e-5)

    # ---- Test 3: multi-tile path (padding 200 -> 256, 2x2 grid with tile=128,
    #      output-resident pre accumulator, partial-suc reduction, padded-softmax mask).
    N2 = 200
    loss2 = jax.random.normal(k2, (N2, W), dtype=jnp.float32)
    rng = np.random.RandomState(1)
    A2 = np.zeros((N2, N2), dtype=np.int8)
    A2[rng.randint(0, N2, 600), rng.randint(0, N2, 600)] = 1
    np.fill_diagonal(A2, 0)
    out3 = jax.block_until_ready(
        rc_scorer(loss2, jnp.asarray(A2), w_series, wg_nz, tile=128))
    ref3 = _reference(loss2, A2, w_series, wg_nz)
    assert out3.shape == (N2, 1)
    assert np.allclose(np.asarray(out3)[:, 0], ref3, atol=1e-5, rtol=1e-5)

    print("KERNEL_OK")
</pallas_src>

<mosaic_0001>
module attributes {stable_mosaic.version = 11 : i64} {
  func.func @_feat_kernel(%arg0: i32, %arg1: memref<128x16xf32, #tpu.memory_space<vmem>>, %arg2: memref<1x16xf32, #tpu.memory_space<vmem>>, %arg3: memref<128x1xf32, #tpu.memory_space<vmem>>) attributes {dimension_semantics = [#tpu.dimension_semantics<parallel>], iteration_bounds = array<i64: 1>, scalar_prefetch = 0 : i64, scratch_operands = 0 : i64, tpu.core_type = #tpu.core_type<tc>, window_params = [{transform_indices = @transform_0, window_bounds = array<i64: 128, 16>}, {pipeline_mode = #tpu.pipeline_mode<synchronous>, transform_indices = @transform_1, window_bounds = array<i64: 1, 16>}, {transform_indices = @transform_2, window_bounds = array<i64: 128, 1>}]} {
    %c0 = arith.constant 0 : index
    %c0_0 = arith.constant 0 : index
    %0 = vector.load %arg1[%c0, %c0_0] : memref<128x16xf32, #tpu.memory_space<vmem>>, vector<128x16xf32>
    %c0_1 = arith.constant 0 : index
    %c0_2 = arith.constant 0 : index
    %1 = vector.load %arg2[%c0_1, %c0_2] : memref<1x16xf32, #tpu.memory_space<vmem>>, vector<1x16xf32>
    %2 = vector.broadcast %1 : vector<1x16xf32> to vector<128x16xf32>
    %3 = arith.mulf %0, %2 : vector<128x16xf32>
    %cst = arith.constant dense<0.000000e+00> : vector<128xf32>
    %4 = vector.multi_reduction <add>, %3, %cst [1] : vector<128x16xf32> to vector<128xf32>
    %5 = vector.shape_cast %4 : vector<128xf32> to vector<128x1xf32>
    %c0_3 = arith.constant 0 : index
    %c0_4 = arith.constant 0 : index
    %6 = vector.load %arg3[%c0_3, %c0_4] : memref<128x1xf32, #tpu.memory_space<vmem>>, vector<128x1xf32>
    tpu.vector_store %arg3[%c0_3, %c0_4], %5 {strides = array<i32>} : memref<128x1xf32, #tpu.memory_space<vmem>>, vector<128x1xf32>,
    return
  }
  func.func @transform_0(%arg0: i32) -> (i32, i32) {
    %c0_i32 = arith.constant 0 : i32
    %c0_i32_0 = arith.constant 0 : i32
    return %arg0, %c0_i32 : i32, i32
  }
  func.func @transform_1(%arg0: i32) -> (i32, i32) {
    %c0_i32 = arith.constant 0 : i32
    %c0_i32_0 = arith.constant 0 : i32
    %c0_i32_1 = arith.constant 0 : i32
    return %c0_i32, %c0_i32_0 : i32, i32
  }
  func.func @transform_2(%arg0: i32) -> (i32, i32) {
    %c0_i32 = arith.constant 0 : i32
    %c0_i32_0 = arith.constant 0 : i32
    return %arg0, %c0_i32 : i32, i32
  }
}

</mosaic_0001>

<llo_original>
// kernel: tpu_custom_call.1
$region0: #{tpu_custom_call.1}
  #allocation0 [shape = 'u32[]', space=smem, size = 0x4, offset = 0x4, fixed_abs, tag = 'smem constant byte address 0x4 - core index']
  #allocation1 [shape = 'u32[144,128]{1,0:T(1,128)}', space=vmem, size = 0x12000, scoped, tag = 'internal scratch']
  %s0 = inlined_call_operand.vmem [shape: f32[128,16], index: 0, kind: input, shape index: {}]
  %s1 = inlined_call_operand.vmem [shape: f32[1,16], index: 1, kind: input, shape index: {}]
  %s2 = inlined_call_operand.vmem [shape: f32[128,1], index: 2, kind: output, shape index: {}]
  %s3 = sld [smem:[#allocation0]]
  $region18: #{tpu_custom_call.1} parent=0
    _
  %s5 = ssub.s32 1, %s3
  %s6 = scalar_select 0, %s5, %s3
  // Predicated region
  $region2: #{tpu_custom_call.1} parent=0 // pred_check
    _
  $region3: #{tpu_custom_call.1} parent=0 // pred_check_branch
    %8 = sbr.rel (0) target = $region5
  $region4: #{tpu_custom_call.1} parent=0 // pred_region
    _
  $region5: #{tpu_custom_call.1} parent=0 // pred_fallthru
    _
  // Predicated region
  $region6: #{tpu_custom_call.1} parent=0 // pred_check
    _
  $region7: #{tpu_custom_call.1} parent=0 // pred_check_branch
    %10 = sbr.rel (0) target = $region9
  $region8: #{tpu_custom_call.1} parent=0 // pred_region
    _
  $region9: #{tpu_custom_call.1} parent=0 // pred_fallthru
    _
  %v11 = vld [vmem:[%s0] sm:$0xff]
  %v12 = vld [vmem:[%s0 + $0x8] sm:$0xff]
  %v13 = vld [vmem:[%s0 + $0x10] sm:$0xff]
  %v14 = vld [vmem:[%s0 + $0x18] sm:$0xff]
  %v15 = vld [vmem:[%s0 + $0x20] sm:$0xff]
  %v16 = vld [vmem:[%s0 + $0x28] sm:$0xff]
  %v17 = vld [vmem:[%s0 + $0x30] sm:$0xff]
  %v18 = vld [vmem:[%s0 + $0x38] sm:$0xff]
  %v19 = vld [vmem:[%s0 + $0x40] sm:$0xff]
  %v20 = vld [vmem:[%s0 + $0x48] sm:$0xff]
  %v21 = vld [vmem:[%s0 + $0x50] sm:$0xff]
  %v22 = vld [vmem:[%s0 + $0x58] sm:$0xff]
  %v23 = vld [vmem:[%s0 + $0x60] sm:$0xff]
  %v24 = vld [vmem:[%s0 + $0x68] sm:$0xff]
  %v25 = vld [vmem:[%s0 + $0x70] sm:$0xff]
  %v26 = vld [vmem:[%s0 + $0x78] sm:$0xff]
  %v27 = vld [vmem:[%s1] sm:$0x1]
  %v29 = vlaneseq
  %v30 = vshrl.u32 %v29, 7
  %v31 = vsub.s32 0, %v30
  %v32 = vrot.slane %v27, %v31
  %v34 = vmul.f32 %v11, %v32
  %v35 = vmul.f32 %v12, %v32
  %v36 = vmul.f32 %v13, %v32
  %v37 = vmul.f32 %v14, %v32
  %v38 = vmul.f32 %v15, %v32
  %v39 = vmul.f32 %v16, %v32
  %v40 = vmul.f32 %v17, %v32
  %v41 = vmul.f32 %v18, %v32
  %v42 = vmul.f32 %v19, %v32
  %v43 = vmul.f32 %v20, %v32
  %v44 = vmul.f32 %v21, %v32
  %v45 = vmul.f32 %v22, %v32
  %v46 = vmul.f32 %v23, %v32
  %v47 = vmul.f32 %v24, %v32
  %v48 = vmul.f32 %v25, %v32
  %v49 = vmul.f32 %v26, %v32
  %vm50 = vcmask 130048
  %v51 = vsel %vm50, %v34, 0.0
  %52 = vadd.xlane.f32.xlu0 %v51
  %v53 = vpop.xlane.xlu0 %52
  %v54 = vsel %vm50, %v35, 0.0
  %55 = vadd.xlane.f32.xlu0 %v54
  %v56 = vpop.xlane.xlu0 %55
  %v57 = vsel %vm50, %v36, 0.0
  %58 = vadd.xlane.f32.xlu0 %v57
  %v59 = vpop.xlane.xlu0 %58
  %v60 = vsel %vm50, %v37, 0.0
  %61 = vadd.xlane.f32.xlu0 %v60
  %v62 = vpop.xlane.xlu0 %61
  %v63 = vsel %vm50, %v38, 0.0
  %64 = vadd.xlane.f32.xlu0 %v63
  %v65 = vpop.xlane.xlu0 %64
  %v66 = vsel %vm50, %v39, 0.0
  %67 = vadd.xlane.f32.xlu0 %v66
  %v68 = vpop.xlane.xlu0 %67
  %v69 = vsel %vm50, %v40, 0.0
  %70 = vadd.xlane.f32.xlu0 %v69
  %v71 = vpop.xlane.xlu0 %70
  %v72 = vsel %vm50, %v41, 0.0
  %73 = vadd.xlane.f32.xlu0 %v72
  %v74 = vpop.xlane.xlu0 %73
  %v75 = vsel %vm50, %v42, 0.0
  %76 = vadd.xlane.f32.xlu0 %v75
  %v77 = vpop.xlane.xlu0 %76
  %v78 = vsel %vm50, %v43, 0.0
  %79 = vadd.xlane.f32.xlu0 %v78
  %v80 = vpop.xlane.xlu0 %79
  %v81 = vsel %vm50, %v44, 0.0
  %82 = vadd.xlane.f32.xlu0 %v81
  %v83 = vpop.xlane.xlu0 %82
  %v84 = vsel %vm50, %v45, 0.0
  %85 = vadd.xlane.f32.xlu0 %v84
  %v86 = vpop.xlane.xlu0 %85
  %v87 = vsel %vm50, %v46, 0.0
  %88 = vadd.xlane.f32.xlu0 %v87
  %v89 = vpop.xlane.xlu0 %88
  %v90 = vsel %vm50, %v47, 0.0
  %91 = vadd.xlane.f32.xlu0 %v90
  %v92 = vpop.xlane.xlu0 %91
  %v93 = vsel %vm50, %v48, 0.0
  %94 = vadd.xlane.f32.xlu0 %v93
  %v95 = vpop.xlane.xlu0 %94
  %v96 = vsel %vm50, %v49, 0.0
  %97 = vadd.xlane.f32.xlu0 %v96
  %v98 = vpop.xlane.xlu0 %97
  %vm99 = vcmask 7168
  %100 = vst.msk [vmem:[%s2] sm:$0xff] %vm99, %v53
  %101 = vst.msk [vmem:[%s2 + $0x8] sm:$0xff] %vm99, %v56
  %102 = vst.msk [vmem:[%s2 + $0x10] sm:$0xff] %vm99, %v59
  %103 = vst.msk [vmem:[%s2 + $0x18] sm:$0xff] %vm99, %v62
  %104 = vst.msk [vmem:[%s2 + $0x20] sm:$0xff] %vm99, %v65
  %105 = vst.msk [vmem:[%s2 + $0x28] sm:$0xff] %vm99, %v68
  %106 = vst.msk [vmem:[%s2 + $0x30] sm:$0xff] %vm99, %v71
  %107 = vst.msk [vmem:[%s2 + $0x38] sm:$0xff] %vm99, %v74
  %108 = vst.msk [vmem:[%s2 + $0x40] sm:$0xff] %vm99, %v77
  %109 = vst.msk [vmem:[%s2 + $0x48] sm:$0xff] %vm99, %v80
  %110 = vst.msk [vmem:[%s2 + $0x50] sm:$0xff] %vm99, %v83
  %111 = vst.msk [vmem:[%s2 + $0x58] sm:$0xff] %vm99, %v86
  %112 = vst.msk [vmem:[%s2 + $0x60] sm:$0xff] %vm99, %v89
  %113 = vst.msk [vmem:[%s2 + $0x68] sm:$0xff] %vm99, %v92
  %114 = vst.msk [vmem:[%s2 + $0x70] sm:$0xff] %vm99, %v95
  %115 = vst.msk [vmem:[%s2 + $0x78] sm:$0xff] %vm99, %v98
  // Predicated region
  $region10: #{tpu_custom_call.1} parent=0 // pred_check
    _
  $region11: #{tpu_custom_call.1} parent=0 // pred_check_branch
    %117 = sbr.rel (0) target = $region13
  $region12: #{tpu_custom_call.1} parent=0 // pred_region
    _
  $region13: #{tpu_custom_call.1} parent=0 // pred_fallthru
    _
  // Predicated region
  $region14: #{tpu_custom_call.1} parent=0 // pred_check
    _
  $region15: #{tpu_custom_call.1} parent=0 // pred_check_branch
    %119 = sbr.rel (0) target = $region17
  $region16: #{tpu_custom_call.1} parent=0 // pred_region
    _
  $region17: #{tpu_custom_call.1} parent=0 // pred_fallthru
    _

</llo_original>
